<compile_context>
chip_gen: v7x
topology: tpu7x:2x2x1
jax: 0.10.0
libtpu: 0.0.40
codegen_flags: <defaults>
</compile_context>

<pallas_src>
import jax
import jax.numpy as jnp
from jax.experimental import pallas as pl
from jax.experimental.pallas import tpu as pltpu


def _weighted_layer_pool_kernel(w_ref, hs_ref, mask_ref, out_ref, acc_ref, msum_ref):
    """Grid = (b_tile, layer, s_tile).

    w_ref    : SMEM [L]           normalized layer weights (w_l / sum w)
    hs_ref   : VMEM [TB, TS, H]   hidden-state tile for layer `layer_start + l`
    mask_ref : VMEM [TB, TS]      attention-mask tile
    out_ref  : VMEM [TB, H]       pooled output tile (written on last (l, s) step)
    acc_ref  : VMEM [TB, H]  f32  running weighted masked sum
    msum_ref : VMEM [TB, 1]  f32  running mask sum
    """
    l = pl.program_id(1)
    s = pl.program_id(2)
    is_first = (l == 0) & (s == 0)
    is_last = (l == pl.num_programs(1) - 1) & (s == pl.num_programs(2) - 1)

    @pl.when(is_first)
    def _():
        acc_ref[...] = jnp.zeros_like(acc_ref)
        msum_ref[...] = jnp.zeros_like(msum_ref)

    mask = mask_ref[...].astype(jnp.float32)          # [TB, TS]
    hs = hs_ref[...].astype(jnp.float32)              # [TB, TS, H] (upcast in-kernel)

    # Per-layer, per-S-tile masked partial sum, scaled by the normalized layer weight.
    partial = jnp.sum(hs * mask[:, :, None], axis=1)  # [TB, H]
    acc_ref[...] += w_ref[l] * partial

    # Count mask tokens only once (on the first layer pass).
    @pl.when(l == 0)
    def _():
        msum_ref[...] += jnp.sum(mask, axis=1, keepdims=True)

    @pl.when(is_last)
    def _():
        denom = jnp.maximum(msum_ref[...], 1e-9)      # torch.clamp(min=1e-9)
        out_ref[...] = (acc_ref[...] / denom).astype(out_ref.dtype)


def _pick_seq_tile(S, tb, H, itemsize, budget_bytes):
    """Largest multiple-of-128 divisor of S whose [tb, TS, H] block fits the budget;
    falls back to 128 (smallest 128-divisor) or full S for small/awkward sequences."""
    cands = [c for c in (4096, 2048, 1024, 512, 256, 128) if S % c == 0]
    for c in cands:
        if tb * c * H * itemsize <= budget_bytes:
            return c
    if cands:
        return cands[-1]
    return S  # S < 128 or not 128-divisible: take the whole sequence (full-dim escape)


def weighted_layer_pooling(hidden_states, mask, layer_weights, layer_start=4,
                           *, max_block_bytes=6 * 1024 * 1024):
    """hidden_states: [L_total, B, S, H] (any float dtype); mask: [B, S];
    layer_weights: [L_total - layer_start]."""
    L_total, B, S, H = hidden_states.shape
    L = L_total - layer_start
    assert layer_weights.shape == (L,)
    assert mask.shape == (B, S)

    # Fold the 1/sum(w) normalization into the per-layer weights (L scalars on host),
    # so the kernel never does a full-tensor divide.
    w32 = layer_weights.astype(jnp.float32)
    w_norm = w32 / jnp.sum(w32)

    itemsize = jnp.dtype(hidden_states.dtype).itemsize
    TB = 8 if (B % 8 == 0) else B
    TS = _pick_seq_tile(S, TB, H, itemsize, max_block_bytes)

    grid = (B // TB, L, S // TS)  # batch (parallel), layer (reduce), seq (reduce)

    kernel = pl.pallas_call(
        _weighted_layer_pool_kernel,
        out_shape=jax.ShapeDtypeStruct((B, H), jnp.float32),
        grid_spec=pltpu.PrefetchScalarGridSpec(
            num_scalar_prefetch=0,
            grid=grid,
            in_specs=[
                # Normalized layer weights: whole array in SMEM (scalar reads).
                pl.BlockSpec(memory_space=pltpu.MemorySpace.SMEM),
                # Hidden states: size-1 (squeezed) layer block with layer_start baked
                # into the index_map -> no wrapper-side slice copy; full H (lane-dense).
                pl.BlockSpec((None, TB, TS, H),
                             lambda b, l, s: (layer_start + l, b, s, 0)),
                # Attention mask tile.
                pl.BlockSpec((TB, TS), lambda b, l, s: (b, s)),
            ],
            out_specs=pl.BlockSpec((TB, H), lambda b, l, s: (b, 0)),
            scratch_shapes=[
                pltpu.VMEM((TB, H), jnp.float32),   # weighted masked-sum accumulator
                pltpu.VMEM((TB, 1), jnp.float32),   # mask-sum accumulator
            ],
        ),
        compiler_params=pltpu.CompilerParams(
            dimension_semantics=("parallel", "arbitrary", "arbitrary"),
            vmem_limit_bytes=32 * 1024 * 1024,  # safe on v5e/v6e/v7x; blocks sized to fit
        ),
    )
    return kernel(w_norm, hidden_states, mask)


def _reference(hidden_states, mask, layer_weights, layer_start=4):
    """Pure-JAX reference mirroring the PyTorch module semantics."""
    hs = hidden_states[layer_start:].astype(jnp.float32)            # [L, B, S, H]
    w = layer_weights.astype(jnp.float32)[:, None, None, None]      # [L, 1, 1, 1]
    weighted_avg = (w * hs).sum(axis=0) / layer_weights.astype(jnp.float32).sum()
    m = mask.astype(jnp.float32)[:, :, None]                        # [B, S, 1]
    sum_emb = (weighted_avg * m).sum(axis=1)                        # [B, H]
    sum_mask = jnp.clip(m.sum(axis=1), 1e-9, None)                  # [B, 1]
    return sum_emb / sum_mask


if __name__ == "__main__":
    key = jax.random.PRNGKey(0)
    k_hs, k_mask, k_hs2, k_mask2, k_w2 = jax.random.split(key, 5)

    # --- Test 1: module-default small config (f32, single-tile grid) ---
    num_hidden_layers, layer_start = 8, 4
    B, S, H = 2, 8, 32

    hidden_states = jax.random.normal(
        k_hs, (num_hidden_layers, B, S, H), dtype=jnp.float32)
    mask = (jax.random.uniform(k_mask, (B, S)) < 0.7).astype(jnp.float32)
    mask = mask.at[:, 0].set(1.0)  # at least one valid token per row
    layer_weights = jnp.ones((num_hidden_layers - layer_start,), dtype=jnp.float32)

    out = weighted_layer_pooling(hidden_states, mask, layer_weights, layer_start)
    jax.block_until_ready(out)
    ref = _reference(hidden_states, mask, layer_weights, layer_start)
    assert out.shape == (B, H)
    assert jnp.allclose(out, ref, atol=1e-4, rtol=1e-4), "mismatch vs reference (f32)"

    # --- Test 2: bf16 activations, forced multi-tile grid (exercises the
    #             batch/layer/sequence accumulation path + native-dtype streaming) ---
    nl2, ls2 = 6, 2
    B2, S2, H2 = 16, 256, 128
    hs2 = jax.random.normal(
        k_hs2, (nl2, B2, S2, H2), dtype=jnp.float32).astype(jnp.bfloat16)
    mask2 = (jax.random.uniform(k_mask2, (B2, S2)) < 0.8).astype(jnp.float32)
    mask2 = mask2.at[:, 0].set(1.0)
    w2 = jax.random.uniform(k_w2, (nl2 - ls2,), dtype=jnp.float32) + 0.5

    out2 = weighted_layer_pooling(hs2, mask2, w2, ls2, max_block_bytes=64 * 1024)
    jax.block_until_ready(out2)
    ref2 = _reference(hs2, mask2, w2, ls2)
    assert out2.shape == (B2, H2)
    assert jnp.allclose(out2, ref2, atol=2e-3, rtol=2e-3), "mismatch vs reference (bf16)"

    print("KERNEL_OK")
</pallas_src>

<mosaic_0001>
module attributes {stable_mosaic.version = 11 : i64} {
  func.func @_weighted_layer_pool_kernel(%arg0: i32, %arg1: i32, %arg2: i32, %arg3: memref<4xf32, #tpu.memory_space<smem>>, %arg4: memref<1x2x8x32xf32, #tpu.memory_space<vmem>>, %arg5: memref<2x8xf32, #tpu.memory_space<vmem>>, %arg6: memref<2x32xf32, #tpu.memory_space<vmem>>, %arg7: memref<2x32xf32, #tpu.memory_space<vmem>>, %arg8: memref<2x1xf32, #tpu.memory_space<vmem>>) attributes {dimension_semantics = [#tpu.dimension_semantics<parallel>, #tpu.dimension_semantics<arbitrary>, #tpu.dimension_semantics<arbitrary>], iteration_bounds = array<i64: 1, 4, 1>, scalar_prefetch = 0 : i64, scratch_operands = 2 : i64, tpu.core_type = #tpu.core_type<tc>, window_params = [{transform_indices = @transform_0, window_bounds = array<i64: 4>}, {transform_indices = @transform_1, window_bounds = array<i64: 1, 2, 8, 32>}, {transform_indices = @transform_2, window_bounds = array<i64: 2, 8>}, {transform_indices = @transform_3, window_bounds = array<i64: 2, 32>}]} {
    %c0_i32 = arith.constant 0 : i32
    %0 = arith.cmpi eq, %arg1, %c0_i32 : i32
    %c0_i32_0 = arith.constant 0 : i32
    %1 = arith.cmpi eq, %arg2, %c0_i32_0 : i32
    %2 = arith.andi %0, %1 : i1
    %c3_i32 = arith.constant 3 : i32
    %3 = arith.cmpi eq, %arg1, %c3_i32 : i32
    %c0_i32_1 = arith.constant 0 : i32
    %4 = arith.cmpi eq, %arg2, %c0_i32_1 : i32
    %5 = arith.andi %3, %4 : i1
    %6 = arith.extui %2 : i1 to i32
    %c0_i32_2 = arith.constant 0 : i32
    %7 = arith.cmpi ne, %6, %c0_i32_2 : i32
    scf.if %7 {
      %cst_15 = arith.constant 0.000000e+00 : f32
      %27 = vector.broadcast %cst_15 : f32 to vector<2x32xf32>
      %c0_16 = arith.constant 0 : index
      %c0_17 = arith.constant 0 : index
      %28 = vector.load %arg7[%c0_16, %c0_17] : memref<2x32xf32, #tpu.memory_space<vmem>>, vector<2x32xf32>
      tpu.vector_store %arg7[%c0_16, %c0_17], %27 {strides = array<i32>} : memref<2x32xf32, #tpu.memory_space<vmem>>, vector<2x32xf32>,
      %cst_18 = arith.constant 0.000000e+00 : f32
      %29 = vector.broadcast %cst_18 : f32 to vector<2x1xf32>
      %c0_19 = arith.constant 0 : index
      %c0_20 = arith.constant 0 : index
      %30 = vector.load %arg8[%c0_19, %c0_20] : memref<2x1xf32, #tpu.memory_space<vmem>>, vector<2x1xf32>
      tpu.vector_store %arg8[%c0_19, %c0_20], %29 {strides = array<i32>} : memref<2x1xf32, #tpu.memory_space<vmem>>, vector<2x1xf32>,
    } else {
    }
    %c0 = arith.constant 0 : index
    %c0_3 = arith.constant 0 : index
    %8 = vector.load %arg5[%c0, %c0_3] : memref<2x8xf32, #tpu.memory_space<vmem>>, vector<2x8xf32>
    %c0_4 = arith.constant 0 : index
    %c0_5 = arith.constant 0 : index
    %c0_6 = arith.constant 0 : index
    %c0_7 = arith.constant 0 : index
    %9 = vector.load %arg4[%c0_4, %c0_5, %c0_6, %c0_7] : memref<1x2x8x32xf32, #tpu.memory_space<vmem>>, vector<1x2x8x32xf32>
    %10 = vector.shape_cast %9 : vector<1x2x8x32xf32> to vector<2x8x32xf32>
    %11 = vector.shape_cast %8 : vector<2x8xf32> to vector<2x8x1xf32>
    %12 = vector.broadcast %11 : vector<2x8x1xf32> to vector<2x8x32xf32>
    %13 = arith.mulf %10, %12 : vector<2x8x32xf32>
    %cst = arith.constant dense<0.000000e+00> : vector<2x32xf32>
    %14 = vector.multi_reduction <add>, %13, %cst [1] : vector<2x8x32xf32> to vector<2x32xf32>
    %c0_8 = arith.constant 0 : index
    %c0_9 = arith.constant 0 : index
    %15 = vector.load %arg7[%c0_8, %c0_9] : memref<2x32xf32, #tpu.memory_space<vmem>>, vector<2x32xf32>
    %16 = arith.index_cast %arg1 : i32 to index
    %17 = memref.load %arg3[%16] : memref<4xf32, #tpu.memory_space<smem>>
    %18 = vector.broadcast %17 : f32 to vector<2x32xf32>
    %19 = arith.mulf %18, %14 : vector<2x32xf32>
    %20 = arith.addf %15, %19 : vector<2x32xf32>
    %c0_10 = arith.constant 0 : index
    %c0_11 = arith.constant 0 : index
    %21 = vector.load %arg7[%c0_10, %c0_11] : memref<2x32xf32, #tpu.memory_space<vmem>>, vector<2x32xf32>
    tpu.vector_store %arg7[%c0_10, %c0_11], %20 {strides = array<i32>} : memref<2x32xf32, #tpu.memory_space<vmem>>, vector<2x32xf32>,
    %c0_i32_12 = arith.constant 0 : i32
    %22 = arith.cmpi eq, %arg1, %c0_i32_12 : i32
    %23 = arith.extui %22 : i1 to i32
    %c0_i32_13 = arith.constant 0 : i32
    %24 = arith.cmpi ne, %23, %c0_i32_13 : i32
    scf.if %24 {
      %c0_15 = arith.constant 0 : index
      %c0_16 = arith.constant 0 : index
      %27 = vector.load %arg8[%c0_15, %c0_16] : memref<2x1xf32, #tpu.memory_space<vmem>>, vector<2x1xf32>
      %cst_17 = arith.constant dense<0.000000e+00> : vector<2xf32>
      %28 = vector.multi_reduction <add>, %8, %cst_17 [1] : vector<2x8xf32> to vector<2xf32>
      %29 = vector.shape_cast %28 : vector<2xf32> to vector<2x1xf32>
      %30 = arith.addf %27, %29 : vector<2x1xf32>
      %c0_18 = arith.constant 0 : index
      %c0_19 = arith.constant 0 : index
      %31 = vector.load %arg8[%c0_18, %c0_19] : memref<2x1xf32, #tpu.memory_space<vmem>>, vector<2x1xf32>
      tpu.vector_store %arg8[%c0_18, %c0_19], %30 {strides = array<i32>} : memref<2x1xf32, #tpu.memory_space<vmem>>, vector<2x1xf32>,
    } else {
    }
    %25 = arith.extui %5 : i1 to i32
    %c0_i32_14 = arith.constant 0 : i32
    %26 = arith.cmpi ne, %25, %c0_i32_14 : i32
    scf.if %26 {
      %c0_15 = arith.constant 0 : index
      %c0_16 = arith.constant 0 : index
      %27 = vector.load %arg8[%c0_15, %c0_16] : memref<2x1xf32, #tpu.memory_space<vmem>>, vector<2x1xf32>
      %cst_17 = arith.constant 9.99999971E-10 : f32
      %28 = vector.broadcast %cst_17 : f32 to vector<2x1xf32>
      %29 = arith.maximumf %27, %28 : vector<2x1xf32>
      %c0_18 = arith.constant 0 : index
      %c0_19 = arith.constant 0 : index
      %30 = vector.load %arg7[%c0_18, %c0_19] : memref<2x32xf32, #tpu.memory_space<vmem>>, vector<2x32xf32>
      %31 = vector.broadcast %29 : vector<2x1xf32> to vector<2x32xf32>
      %32 = arith.divf %30, %31 : vector<2x32xf32>
      %c0_20 = arith.constant 0 : index
      %c0_21 = arith.constant 0 : index
      %33 = vector.load %arg6[%c0_20, %c0_21] : memref<2x32xf32, #tpu.memory_space<vmem>>, vector<2x32xf32>
      tpu.vector_store %arg6[%c0_20, %c0_21], %32 {strides = array<i32>} : memref<2x32xf32, #tpu.memory_space<vmem>>, vector<2x32xf32>,
    } else {
    }
    return
  }
  func.func @transform_0(%arg0: i32, %arg1: i32, %arg2: i32) -> i32 {
    %c0_i32 = arith.constant 0 : i32
    %c0_i32_0 = arith.constant 0 : i32
    return %c0_i32 : i32
  }
  func.func @transform_1(%arg0: i32, %arg1: i32, %arg2: i32) -> (i32, i32, i32, i32) {
    %c4_i32 = arith.constant 4 : i32
    %0 = arith.addi %c4_i32, %arg1 : i32
    %c0_i32 = arith.constant 0 : i32
    %c0_i32_0 = arith.constant 0 : i32
    return %0, %arg0, %arg2, %c0_i32 : i32, i32, i32, i32
  }
  func.func @transform_2(%arg0: i32, %arg1: i32, %arg2: i32) -> (i32, i32) {
    %c0_i32 = arith.constant 0 : i32
    return %arg0, %arg2 : i32, i32
  }
  func.func @transform_3(%arg0: i32, %arg1: i32, %arg2: i32) -> (i32, i32) {
    %c0_i32 = arith.constant 0 : i32
    %c0_i32_0 = arith.constant 0 : i32
    return %arg0, %c0_i32 : i32, i32
  }
}

</mosaic_0001>

<llo_original>
// kernel: tpu_custom_call.1
$region0: #{tpu_custom_call.1}
  #allocation0 [shape = 'u32[]', space=smem, size = 0x4, offset = 0x4, fixed_abs, tag = 'smem constant byte address 0x4 - core index']
  #allocation1 [shape = 'u32[144,128]{1,0:T(1,128)}', space=vmem, size = 0x12000, scoped, tag = 'internal scratch']
  #allocation2 [shape = 'f32[2,32]{1,0:T(2,128)}', space=vmem, size = 0x400, scoped, tag = 'scratch operand']
  #allocation3 [shape = 'f32[2,1]{1,0:T(2,128)}', space=vmem, size = 0x400, scoped, tag = 'scratch operand']
  %s0 = inlined_call_operand.hbm [shape: f32[4], index: 0, kind: input, shape index: {}]
  %s1 = inlined_call_operand.hbm [shape: f32[8,2,8,32], index: 1, kind: input, shape index: {}]
  %s2 = inlined_call_operand.vmem [shape: f32[2,8], index: 2, kind: input, shape index: {}]
  %s3 = inlined_call_operand.hbm [shape: f32[2,32], index: 3, kind: output, shape index: {}]
  %s4 = sld [smem:[#allocation0]]
  $region65: #{tpu_custom_call.1} parent=0
    _
  %s6 = ssub.s32 1, %s4
  %s7 = scalar_select 0, %s6, %s4
  $region1: #{tpu_custom_call.1} parent=0
    #allocation4 [shape = 'u8[512]{0}', space=smem, size = 0x200, scoped, tag = 'input window, operand 0, single buffered']
    #allocation5 [shape = 's32[2]{0}', space=sflag, size = 0x8, scoped, tag = 'scoped memory for tpu_custom_call.1']
    #allocation6 [shape = 's32[2]{0}', space=sflag, size = 0x8, scoped, tag = 'scoped memory for tpu_custom_call.1']
    #allocation7 [shape = 's32[2]{0}', space=sflag, size = 0x8, scoped, tag = 'scoped memory for tpu_custom_call.1']
    #allocation8 [shape = 'u8[16384]{0}', space=vmem, size = 0x4000, scoped, tag = 'input window, operand 1']
    #allocation9 [shape = 'u8[1024]{0}', space=vmem, size = 0x400, scoped, tag = 'output window, operand 0, single buffered']
    %8 = vsyncpa [#allocation7], 0
    %9 = vsyncpa [#allocation5], 0
    %s10 = scalar_lea.sflag [#allocation5], 1
    %11 = vsyncpa %s10, 0
    %12 = vsyncpa [#allocation6], 0
    loop: start=0, step=1, limit=6
    $region2: #{tpu_custom_call.1} parent=1 // loop_pre_header
      _
    $region3: #{tpu_custom_call.1} parent=1 // loop_header
      %s14 = sphi 0, %s18
      %p15 = scmp.ge.s32.totalorder %s14, 6
      %s21 = sphi 0, %s40
      %s22 = sphi 0, %s36
      %s23 = sphi 0, %s32
      %s24 = sphi 0, %s21
      %s25 = sphi 0, %s22
      %s26 = sphi 0, %s23
      %s27 = sphi 0, %s24
      %s28 = sphi 0, %s25
      %s29 = sphi 0, %s26
      %s41 = sphi 0, %s41
      %s43 = sphi 0, %s41
      %s44 = sphi 0, %s43
      %s58 = sphi 0, %s44
      %s70 = sphi 0, %s72
      %s73 = sphi 0, %s70
      %s74 = sphi 0, %s73
      %s90 = sphi 0, %s74
      %s98 = sphi 0, %s100
      %s101 = sphi 0, %s98
      %s102 = sphi 0, %s101
      %s118 = sphi 0, %s102
      %s124 = sphi 0, %s126
      %s127 = sphi 0, %s124
      %s128 = sphi 0, %s127
      %s144 = sphi 0, %s128
    $region4: #{tpu_custom_call.1} parent=1 // loop_header_branch
      %17 = sbr.rel (%p15) target = $region8
    $region5: #{tpu_custom_call.1} parent=1 // loop_body
      %s19 = ssub.s32 %s14, 1
      %s20 = ssub.s32 %s14, 2
      %s30 = sadd.s32 1, %s23
      %p31 = scmp.ge.s32.totalorder %s30, 1
      %s32 = scalar_select %p31, 0, %s30
      %s33 = sadd.s32 1, %s22
      %s34 = scalar_select %p31, %s33, %s22
      %p35 = scmp.ge.s32.totalorder %s34, 4
      %s36 = scalar_select %p35, 0, %s34
      %s37 = sadd.s32 1, %s21
      %s38 = scalar_select %p35, %s37, %s21
      %p39 = scmp.ge.s32.totalorder %s38, 1
      %s40 = scalar_select %p39, 0, %s38
      %s42 = sadd.s32 %s41, 1
      %p45 = scmp.eq.s32.totalorder %s14, 3
      %p46 = scmp.ne.s32.totalorder %s41, %s43
      %p47 = scmp.eq.s32.totalorder %s14, 0
      %p48 = por %p46, %p47
      %p49 = scmp.ne.s32.totalorder %s41, %s43
      %p50 = scmp.eq.s32.totalorder %s19, 3
      %p51 = por %p49, %p50
      %p52 = scmp.ne.s32.totalorder %s43, %s44
      %p53 = scmp.eq.s32.totalorder %s19, 0
      %p54 = por %p52, %p53
      %p55 = scmp.ne.s32.totalorder %s43, %s44
      %p56 = scmp.eq.s32.totalorder %s20, 3
      %p57 = por %p55, %p56
      %p59 = scmp.ne.s32.totalorder %s44, %s58
      %p60 = scmp.eq.s32.totalorder %s20, 0
      %p61 = por %p59, %p60
      %s62 = sadd.s32 %s22, 4
      %s63 = sadd.s32 %s36, 4
      %s64 = ssub.s32 %s62, %s63
      %s65 = ssub.s32 %s21, %s40
      %s66 = sor.u32 %s64, %s65
      %s67 = ssub.s32 %s23, %s32
      %s68 = sor.u32 %s66, %s67
      %p69 = scmp.eq.s32.totalorder %s68, 0
      %s71 = sadd.s32 %s70, 1
      %s72 = scalar_select %p69, %s70, %s71
      %p75 = pneg %p69
      %p76 = scmp.eq.s32.totalorder %s14, 3
      %p77 = por %p75, %p76
      %p78 = scmp.ne.s32.totalorder %s70, %s73
      %p79 = scmp.eq.s32.totalorder %s14, 0
      %p80 = por %p78, %p79
      %p81 = scmp.ne.s32.totalorder %s70, %s73
      %p82 = scmp.eq.s32.totalorder %s19, 3
      %p83 = por %p81, %p82
      %p84 = scmp.ne.s32.totalorder %s73, %s74
      %p85 = scmp.eq.s32.totalorder %s19, 0
      %p86 = por %p84, %p85
      %p87 = scmp.ne.s32.totalorder %s73, %s74
      %p88 = scmp.eq.s32.totalorder %s20, 3
      %p89 = por %p87, %p88
      %p91 = scmp.ne.s32.totalorder %s74, %s90
      %p92 = scmp.eq.s32.totalorder %s20, 0
      %p93 = por %p91, %p92
      %s94 = ssub.s32 %s21, %s40
      %s95 = ssub.s32 %s23, %s32
      %s96 = sor.u32 %s94, %s95
      %p97 = scmp.eq.s32.totalorder %s96, 0
      %s99 = sadd.s32 %s98, 1
      %s100 = scalar_select %p97, %s98, %s99
      %p103 = pneg %p97
      %p104 = scmp.eq.s32.totalorder %s14, 3
      %p105 = por %p103, %p104
      %p106 = scmp.ne.s32.totalorder %s98, %s101
      %p107 = scmp.eq.s32.totalorder %s14, 0
      %p108 = por %p106, %p107
      %p109 = scmp.ne.s32.totalorder %s98, %s101
      %p110 = scmp.eq.s32.totalorder %s19, 3
      %p111 = por %p109, %p110
      %p112 = scmp.ne.s32.totalorder %s101, %s102
      %p113 = scmp.eq.s32.totalorder %s19, 0
      %p114 = por %p112, %p113
      %p115 = scmp.ne.s32.totalorder %s101, %s102
      %p116 = scmp.eq.s32.totalorder %s20, 3
      %p117 = por %p115, %p116
      %p119 = scmp.ne.s32.totalorder %s102, %s118
      %p120 = scmp.eq.s32.totalorder %s20, 0
      %p121 = por %p119, %p120
      %s122 = ssub.s32 %s21, %s40
      %p123 = scmp.eq.s32.totalorder %s122, 0
      %s125 = sadd.s32 %s124, 1
      %s126 = scalar_select %p123, %s124, %s125
      %p129 = pneg %p123
      %p130 = scmp.eq.s32.totalorder %s14, 3
      %p131 = por %p129, %p130
      %p132 = scmp.ne.s32.totalorder %s124, %s127
      %p133 = scmp.eq.s32.totalorder %s14, 0
      %p134 = por %p132, %p133
      %p135 = scmp.ne.s32.totalorder %s124, %s127
      %p136 = scmp.eq.s32.totalorder %s19, 3
      %p137 = por %p135, %p136
      %p138 = scmp.ne.s32.totalorder %s127, %s128
      %p139 = scmp.eq.s32.totalorder %s19, 0
      %p140 = por %p138, %p139
      %p141 = scmp.ne.s32.totalorder %s127, %s128
      %p142 = scmp.eq.s32.totalorder %s20, 3
      %p143 = por %p141, %p142
      %p145 = scmp.ne.s32.totalorder %s128, %s144
      %p146 = scmp.eq.s32.totalorder %s20, 0
      %p147 = por %p145, %p146
      %p148 = scmp.le.s32.totalorder 1, %s14
      %p149 = scmp.lt.s32.totalorder %s14, 5
      %p150 = pnand %p148, %p149
      %p151 = pneg %p150
      // Predicated region
      $region9: #{tpu_custom_call.1} parent=5 // pred_check
        _
      $region10: #{tpu_custom_call.1} parent=5 // pred_check_branch
        %153 = sbr.rel (%p150) target = $region12
      $region11: #{tpu_custom_call.1} parent=5 // pred_region
        %s154 = ssub.s32 %s14, 1
        // Predicated region
        $region13: #{tpu_custom_call.1} parent=11 // pred_check
          %p155 = pneg %p54
        $region14: #{tpu_custom_call.1} parent=11 // pred_check_branch
          %157 = sbr.rel (%p155) target = $region16
        $region15: #{tpu_custom_call.1} parent=11 // pred_region
          %s159 = ssub.s32 16, 16
          %160 = vsyncadd [#allocation7], %s159
          %163 = dma.hbm_to_smem %s0, 16, [#allocation4], [#allocation7]
        $region16: #{tpu_custom_call.1} parent=11 // pred_fallthru
          _
        // Predicated region
        $region17: #{tpu_custom_call.1} parent=11 // pred_check
          %p164 = pneg %p114
        $region18: #{tpu_custom_call.1} parent=11 // pred_check_branch
          %166 = sbr.rel (%p164) target = $region20
        $region19: #{tpu_custom_call.1} parent=11 // pred_region
          %p167 = scmp.lt.s32.totalorder %s24, 0
          %s168 = scalar_select %p167, %s24, 0
          %p169 = scmp.lt.s32.totalorder %s26, 0
          %s170 = scalar_select %p169, %s26, 0
          %s171 = sadd.s32 %s170, %s168
          %s172 = smul.addr %s171, 2
          %s173 = scalar_lea.vmem %s2, %s172
        $region20: #{tpu_custom_call.1} parent=11 // pred_fallthru
          _
      $region12: #{tpu_custom_call.1} parent=5 // pred_fallthru
        _
      %p174 = scmp.lt.s32.totalorder %s14, 4
      // Predicated region
      $region21: #{tpu_custom_call.1} parent=5 // pred_check
        %p175 = pneg %p174
      $region22: #{tpu_custom_call.1} parent=5 // pred_check_branch
        %177 = sbr.rel (%p175) target = $region24
      $region23: #{tpu_custom_call.1} parent=5 // pred_region
        // Predicated region
        $region25: #{tpu_custom_call.1} parent=23 // pred_check
          %p178 = pneg %p80
        $region26: #{tpu_custom_call.1} parent=23 // pred_check_branch
          %180 = sbr.rel (%p178) target = $region28
        $region27: #{tpu_custom_call.1} parent=23 // pred_region
          %s181 = sand.u32 %s70, 1
          %s182 = scalar_lea.sflag [#allocation5], %s181
          %s183 = sand.u32 %s70, 1
          %s184 = smul.addr %s183, 16
          %s185 = scalar_lea.vmem [#allocation8], %s184
          %s186 = sadd.s32 %s22, 4
          %s187 = smul.u32 2, %s21
          %s189 = ssub.s32 256, 256
          %190 = vsyncadd %s182, %s189
          %s191 = sadd.s32 %s23, %s187
          %s192 = smul.addr %s186, 2
          %s193 = sadd.s32 %s191, %s192
          %s194 = smul.addr %s193, 128
          %s195 = scalar_lea.hbm %s1, %s194
          %s196 = sshll.u32 %s185, 4
          %s197 = int_to_ptr.vmem [resolvable:$true] %s196
          %202 = dma.hbm_to_vmem [thread:$0]  %s195, 256, %s197, %s182, 128, 128, 8
        $region28: #{tpu_custom_call.1} parent=23 // pred_fallthru
          _
      $region24: #{tpu_custom_call.1} parent=5 // pred_fallthru
        _
      %p203 = scmp.le.s32.totalorder 1, %s14
      %p204 = scmp.lt.s32.totalorder %s14, 5
      %p205 = pnand %p203, %p204
      %p206 = pneg %p205
      // Predicated region
      $region29: #{tpu_custom_call.1} parent=5 // pred_check
        _
      $region30: #{tpu_custom_call.1} parent=5 // pred_check_branch
        %208 = sbr.rel (%p205) target = $region32
      $region31: #{tpu_custom_call.1} parent=5 // pred_region
        %s209 = ssub.s32 %s14, 1
        // Predicated region
        $region33: #{tpu_custom_call.1} parent=31 // pred_check
          %p210 = pneg %p54
        $region34: #{tpu_custom_call.1} parent=31 // pred_check_branch
          %212 = sbr.rel (%p210) target = $region36
        $region35: #{tpu_custom_call.1} parent=31 // pred_region
          %213 = dma.done [#allocation7], 16
        $region36: #{tpu_custom_call.1} parent=31 // pred_fallthru
          _
        %s214 = sand.u32 %s73, 1
        %s215 = scalar_lea.sflag [#allocation5], %s214
        %s216 = sand.u32 %s73, 1
        %s217 = smul.addr %s216, 16
        %s218 = scalar_lea.vmem [#allocation8], %s217
        // Predicated region
        $region37: #{tpu_custom_call.1} parent=31 // pred_check
          %p219 = pneg %p86
        $region38: #{tpu_custom_call.1} parent=31 // pred_check_branch
          %221 = sbr.rel (%p219) target = $region40
        $region39: #{tpu_custom_call.1} parent=31 // pred_region
          %222 = dma.done %s215, 256
        $region40: #{tpu_custom_call.1} parent=31 // pred_fallthru
          _
        %223 = sfence
        %p224 = pneg %p54
        %p225 = pneg %p51
        %s226 = sand.u32 %s73, 1
        %s227 = scalar_lea.sflag [#allocation5], %s226
        %s228 = sand.u32 %s73, 1
        %s229 = smul.addr %s228, 16
        %s230 = scalar_lea.vmem [#allocation8], %s229
        %p231 = pneg %p86
        %p232 = pneg %p83
        %p233 = scmp.lt.s32.totalorder %s24, 0
        %s234 = scalar_select %p233, %s24, 0
        %p235 = scmp.lt.s32.totalorder %s26, 0
        %s236 = scalar_select %p235, %s26, 0
        %s237 = sadd.s32 %s236, %s234
        %s238 = smul.addr %s237, 2
        %s239 = scalar_lea.vmem %s2, %s238
        %p240 = pneg %p114
        %p241 = pneg %p111
        %p242 = pneg %p140
        %p243 = pneg %p137
        %s244 = sadd.s32 %s25, 4
        %s245 = smul.u32 2, %s24
        %p246 = scmp.lt.s32.totalorder %s24, 0
        %s247 = scalar_select %p246, %s24, 0
        %p248 = scmp.lt.s32.totalorder %s26, 0
        %s249 = scalar_select %p248, %s26, 0
        %s250 = sadd.s32 %s249, %s247
        %s251 = smul.addr %s250, 2
        %s252 = scalar_lea.vmem %s2, %s251
        %p253 = scmp.eq.s32.totalorder %s25, 0
        %p254 = scmp.eq.s32.totalorder %s26, 0
        %p255 = pnand %p253, %p254
        %p256 = pneg %p255
        %p257 = scmp.eq.s32.totalorder %s25, 3
        %p258 = pnand %p257, %p254
        %p259 = pneg %p258
        // Predicated region
        $region41: #{tpu_custom_call.1} parent=31 // pred_check
          _
        $region42: #{tpu_custom_call.1} parent=31 // pred_check_branch
          %261 = sbr.rel (%p255) target = $region44
        $region43: #{tpu_custom_call.1} parent=31 // pred_region
          %vm262 = vcmask 254976
          %263 = vst.msk [vmem:[#allocation2] sm:$0x3] %vm262, 0.0
          %vm264 = vcmask 1024
          %265 = vst.msk [vmem:[#allocation3] sm:$0x3] %vm264, 0.0
        $region44: #{tpu_custom_call.1} parent=31 // pred_fallthru
          _
        %v266 = vld [vmem:[%s252] sm:$0x3]
        %v267 = vld [vmem:[%s218] sm:$0xff]
        %v268 = vld [vmem:[%s218 + $0x8] sm:$0xff]
        %v269 = vlaneseq
        %v270 = vshrl.u32 %v269, 7
        %v271 = vsub.s32 0, %v270
        %v272 = vrot.slane %v266, %v271
        %274 = vbcast.lane.b32.xlu0 %v272, 256
        %v275 = vpop.permute.xlu0 %274
        %v276 = vlaneseq
        %v277 = vshrl.u32 %v276, 7
        %v278 = vsub.s32 1, %v277
        %v279 = vrot.slane %v266, %v278
        %281 = vbcast.lane.b32.xlu0 %v279, 256
        %v282 = vpop.permute.xlu0 %281
        %v283 = vmul.f32 %v267, %v275
        %v284 = vmul.f32 %v268, %v282
        %vm285 = vcmask 261120
        %v286 = vsel %vm285, %v283, 0.0
        %v287 = vrot.slane %v286, 4
        %v288 = vadd.f32 %v286, %v287
        %v289 = vrot.slane %v288, 2
        %v290 = vadd.f32 %v288, %v289
        %v291 = vrot.slane %v290, 1
        %v292 = vadd.f32 %v290, %v291
        %v293 = vsel %vm285, %v284, 0.0
        %v294 = vrot.slane %v293, 4
        %v295 = vadd.f32 %v293, %v294
        %v296 = vrot.slane %v295, 2
        %v297 = vadd.f32 %v295, %v296
        %v298 = vrot.slane %v297, 1
        %v299 = vadd.f32 %v297, %v298
        %v300 = vld [vmem:[#allocation2] sm:$0x3]
        %s301 = sld [smem:[#allocation4 + %s25]]
        %v302 = vstv %s301
        %v303 = vmul.f32 %v302, %v292
        %v304 = vmul.f32 %v302, %v299
        %vm307 = vcmask 1041409
        %v308 = vsel %vm307, %v304, %v303
        %v310 = vadd.f32 %v300, %v308
        %vm311 = vcmask 254976
        %312 = vst.msk [vmem:[#allocation2] sm:$0x3] %vm311, %v310
        // Predicated region
        $region45: #{tpu_custom_call.1} parent=31 // pred_check
          %p313 = pneg %p253
        $region46: #{tpu_custom_call.1} parent=31 // pred_check_branch
          %315 = sbr.rel (%p313) target = $region48
        $region47: #{tpu_custom_call.1} parent=31 // pred_region
          %v316 = vld [vmem:[#allocation3] sm:$0x3]
          %vm317 = vcmask 58368
          %v318 = vsel %vm317, %v266, 0.0
          %319 = vadd.xlane.f32.xlu0 %v318
          %v320 = vpop.xlane.xlu0 %319
          %v321 = vadd.f32 %v316, %v320
          %vm322 = vcmask 1024
          %323 = vst.msk [vmem:[#allocation3] sm:$0x3] %vm322, %v321
        $region48: #{tpu_custom_call.1} parent=31 // pred_fallthru
          _
        // Predicated region
        $region49: #{tpu_custom_call.1} parent=31 // pred_check
          _
        $region50: #{tpu_custom_call.1} parent=31 // pred_check_branch
          %325 = sbr.rel (%p258) target = $region52
        $region51: #{tpu_custom_call.1} parent=31 // pred_region
          %v326 = vld [vmem:[#allocation3] sm:$0x3]
          %v327 = vmax.f32 %v326, 1e-09
          %v328 = vld [vmem:[#allocation2] sm:$0x3]
          %330 = vset.pattern.permute.xlu0 0
          %331 = vperm.xlu0 %330, %v327
          %v332 = vpop.permute.xlu0 %331
          %v334 = vrcp.pop %v332
          %v335 = vmul.f32 %v328, %v334
          %336 = vst.msk [vmem:[#allocation9] sm:$0x3] %vm311, %v335
        $region52: #{tpu_custom_call.1} parent=31 // pred_fallthru
          _
        // Predicated region
        $region53: #{tpu_custom_call.1} parent=31 // pred_check
          %p337 = pneg %p137
        $region54: #{tpu_custom_call.1} parent=31 // pred_check_branch
          %339 = sbr.rel (%p337) target = $region56
        $region55: #{tpu_custom_call.1} parent=31 // pred_region
          %s341 = ssub.s32 32, 32
          %342 = vsyncadd [#allocation6], %s341
          %s343 = smul.addr %s24, 32
          %s344 = scalar_lea.hbm %s3, %s343
          %s346 = sshll.u32 [#allocation9], 4
          %s347 = int_to_ptr.vmem [resolvable:$true] %s346
          %349 = dma.vmem_to_hbm [thread:$0]  %s347, 32, %s344, [#allocation6]
        $region56: #{tpu_custom_call.1} parent=31 // pred_fallthru
          _
        // Predicated region
        $region57: #{tpu_custom_call.1} parent=31 // pred_check
          %p350 = pneg %p137
        $region58: #{tpu_custom_call.1} parent=31 // pred_check_branch
          %352 = sbr.rel (%p350) target = $region60
        $region59: #{tpu_custom_call.1} parent=31 // pred_region
          %353 = dma.done [#allocation6], 32
        $region60: #{tpu_custom_call.1} parent=31 // pred_fallthru
          _
      $region32: #{tpu_custom_call.1} parent=5 // pred_fallthru
        _
      %p354 = scmp.le.s32.totalorder 2, %s14
      // Predicated region
      $region61: #{tpu_custom_call.1} parent=5 // pred_check
        %p355 = pneg %p354
      $region62: #{tpu_custom_call.1} parent=5 // pred_check_branch
        %357 = sbr.rel (%p355) target = $region64
      $region63: #{tpu_custom_call.1} parent=5 // pred_region
        %s358 = ssub.s32 %s14, 2
      $region64: #{tpu_custom_call.1} parent=5 // pred_fallthru
        _
    $region6: #{tpu_custom_call.1} parent=1 // loop_footer
      %s18 = sadd.s32 1, %s14
    $region7: #{tpu_custom_call.1} parent=1 // loop_footer_branch
      %13 = sbr.rel target = $region3
    $region8: #{tpu_custom_call.1} parent=1 // loop_exit
      _
    %359 = vsyncpa [#allocation5], 1
    %s360 = scalar_lea.sflag [#allocation5], 1
    %361 = vsyncpa %s360, 1
    %362 = vsyncpa [#allocation6], 1
    %s363 = scalar_lea.sflag [#allocation6], 1
    %364 = vsyncpa %s363, 1
    %365 = vsyncpa [#allocation7], 1
    %s366 = scalar_lea.sflag [#allocation7], 1
    %367 = vsyncpa %s366, 1

</llo_original>
